<compile_context>
chip_gen: v6e
topology: v6e:2x2x1
jax: 0.10.0
libtpu: 0.0.40
codegen_flags: <defaults>
</compile_context>

<pallas_src>
import jax
import jax.numpy as jnp
from jax.experimental import pallas as pl
from jax.experimental.pallas import tpu as pltpu


def _round_up(x, m):
    return ((x + m - 1) // m) * m


def _ode_func_kernel(z_ref, w1_ref, b1_ref, w2_ref, b2_ref, out_ref):
    # z_ref:  (tile, D)  row-tile of latent states (streamed through VMEM)
    # w1_ref: (D, H), b1_ref: (1, H)
    # w2_ref: (H, D), b2_ref: (1, D)   (backwards sign already folded in)
    h = jnp.tanh(
        jnp.dot(z_ref[...], w1_ref[...], preferred_element_type=jnp.float32)
        + b1_ref[...]
    )
    g = jnp.dot(h, w2_ref[...], preferred_element_type=jnp.float32) + b2_ref[...]
    out_ref[...] = g.astype(out_ref.dtype)


def prepare_graph_ode_params(params, backwards=False):
    """One-time parameter prep, hoisted out of the per-solver-step call.

    Folds the `backwards` negation into the (tiny) second-layer weights —
    exact — and reshapes the biases to 2-D rows for lane-major broadcast.
    Call once before the ODE solve; reuse the result for every evaluation.
    """
    w1 = params["w1"]
    b1 = params["b1"].reshape(1, -1)
    w2 = params["w2"]
    b2 = params["b2"].reshape(1, -1)
    if backwards:
        w2 = -w2
        b2 = -b2
    return {"w1": w1, "b1": b1, "w2": w2, "b2": b2}


def graph_ode_func_forward(t_local, z, prepared, *, row_tile=2048):
    """Pallas implementation of GraphODEFunc.forward.

    t_local is unused by the module's forward (kept for API parity).
    z: [N, D] float32 latent states (N = batch * num_nodes).
    prepared: output of prepare_graph_ode_params (sign-folded weights).
    """
    del t_local  # forward() ignores the time point
    w1, b1, w2, b2 = prepared["w1"], prepared["b1"], prepared["w2"], prepared["b2"]
    N, D = z.shape
    H = w1.shape[1]

    # Row-tile selection (f32 sublane tile = 8 rows):
    #   * big tiles (default 2048) to amortize the ~0.35 us per-grid-step cost
    #   * cdiv grid — never pad N up to a multiple of the tile
    #   * if everything fits one tile but N >= 16 rows, split into >= 2 grid
    #     steps so the "parallel" row axis can shard across v7x's two cores.
    row_tile = max(8, _round_up(row_tile, 8))
    N8 = _round_up(N, 8)
    if N8 <= row_tile:
        if N8 >= 16:
            tile = _round_up(pl.cdiv(N8, 2), 8)
        else:
            tile = N8
    else:
        tile = row_tile
    grid = (pl.cdiv(N, tile),)

    itemsize = jnp.dtype(z.dtype).itemsize
    cost = pl.CostEstimate(
        flops=4 * N * D * H,                       # two matmuls (mul+add)
        transcendentals=N * H,                     # tanh
        bytes_accessed=itemsize * (2 * N * D + 2 * D * H + H + D),
    )

    return pl.pallas_call(
        _ode_func_kernel,
        out_shape=jax.ShapeDtypeStruct((N, D), z.dtype),
        grid_spec=pltpu.PrefetchScalarGridSpec(
            num_scalar_prefetch=0,
            grid=grid,
            in_specs=[
                pl.BlockSpec((tile, D), lambda i: (i, 0)),  # z row-tile (streamed)
                pl.BlockSpec((D, H), lambda i: (0, 0)),     # w1 (VMEM-resident)
                pl.BlockSpec((1, H), lambda i: (0, 0)),     # b1
                pl.BlockSpec((H, D), lambda i: (0, 0)),     # w2 (sign folded)
                pl.BlockSpec((1, D), lambda i: (0, 0)),     # b2 (sign folded)
            ],
            out_specs=pl.BlockSpec((tile, D), lambda i: (i, 0)),
        ),
        compiler_params=pltpu.CompilerParams(
            dimension_semantics=("parallel",),
        ),
        cost_estimate=cost,
    )(z, w1, b1, w2, b2)


def init_params(key, latent_dim, hidden_dim):
    """Deterministic parameter init (mimics nn.Linear default uniform init)."""
    k1, k2, k3, k4 = jax.random.split(key, 4)
    lim1 = 1.0 / jnp.sqrt(latent_dim)
    lim2 = 1.0 / jnp.sqrt(hidden_dim)
    return {
        "w1": jax.random.uniform(k1, (latent_dim, hidden_dim), jnp.float32, -lim1, lim1),
        "b1": jax.random.uniform(k2, (hidden_dim,), jnp.float32, -lim1, lim1),
        "w2": jax.random.uniform(k3, (hidden_dim, latent_dim), jnp.float32, -lim2, lim2),
        "b2": jax.random.uniform(k4, (latent_dim,), jnp.float32, -lim2, lim2),
    }


def _reference(z, params, backwards=False):
    h = jnp.tanh(z @ params["w1"] + params["b1"])
    g = h @ params["w2"] + params["b2"]
    return -g if backwards else g


if __name__ == "__main__":
    key = jax.random.PRNGKey(0)
    k_param, k_z = jax.random.split(key)

    batch = 2
    num_nodes = 8
    latent_dim = 32
    hidden_dim = 64
    N = batch * num_nodes  # rows of z (batch * nodes), layout [N, D]

    params = init_params(k_param, latent_dim, hidden_dim)
    z = jax.random.normal(k_z, (N, latent_dim), jnp.float32)
    t_local = jnp.float32(0.0)

    # Weight prep is done ONCE (hoisted out of the per-ODE-step call).
    prepared_fwd = prepare_graph_ode_params(params, backwards=False)
    prepared_bwd = prepare_graph_ode_params(params, backwards=True)

    grad = graph_ode_func_forward(t_local, z, prepared_fwd)
    grad = jax.block_until_ready(grad)

    grad_bwd = graph_ode_func_forward(t_local, z, prepared_bwd)
    grad_bwd = jax.block_until_ready(grad_bwd)

    # Ragged multi-tile configuration: cdiv grid, partial last block (masked
    # write), no padding of N anywhere.
    z_big = jax.random.normal(k_z, (1000, latent_dim), jnp.float32)
    grad_big = graph_ode_func_forward(t_local, z_big, prepared_fwd)
    grad_big = jax.block_until_ready(grad_big)

    ref = _reference(z, params, backwards=False)
    ref_bwd = _reference(z, params, backwards=True)
    ref_big = _reference(z_big, params, backwards=False)
    assert jnp.allclose(grad, ref, atol=1e-5, rtol=1e-5)
    assert jnp.allclose(grad_bwd, ref_bwd, atol=1e-5, rtol=1e-5)
    assert jnp.allclose(grad_big, ref_big, atol=1e-5, rtol=1e-5)

    print("KERNEL_OK")
</pallas_src>

<mosaic_0001>
module attributes {stable_mosaic.version = 11 : i64} {
  func.func @_ode_func_kernel(%arg0: i32, %arg1: memref<8x32xf32, #tpu.memory_space<vmem>>, %arg2: memref<32x64xf32, #tpu.memory_space<vmem>>, %arg3: memref<1x64xf32, #tpu.memory_space<vmem>>, %arg4: memref<64x32xf32, #tpu.memory_space<vmem>>, %arg5: memref<1x32xf32, #tpu.memory_space<vmem>>, %arg6: memref<8x32xf32, #tpu.memory_space<vmem>>) attributes {dimension_semantics = [#tpu.dimension_semantics<parallel>], iteration_bounds = array<i64: 2>, scalar_prefetch = 0 : i64, scratch_operands = 0 : i64, tpu.core_type = #tpu.core_type<tc>, window_params = [{transform_indices = @transform_0, window_bounds = array<i64: 8, 32>}, {pipeline_mode = #tpu.pipeline_mode<synchronous>, transform_indices = @transform_1, window_bounds = array<i64: 32, 64>}, {pipeline_mode = #tpu.pipeline_mode<synchronous>, transform_indices = @transform_2, window_bounds = array<i64: 1, 64>}, {pipeline_mode = #tpu.pipeline_mode<synchronous>, transform_indices = @transform_3, window_bounds = array<i64: 64, 32>}, {pipeline_mode = #tpu.pipeline_mode<synchronous>, transform_indices = @transform_4, window_bounds = array<i64: 1, 32>}, {transform_indices = @transform_5, window_bounds = array<i64: 8, 32>}]} {
    %c0 = arith.constant 0 : index
    %c0_0 = arith.constant 0 : index
    %0 = vector.load %arg1[%c0, %c0_0] : memref<8x32xf32, #tpu.memory_space<vmem>>, vector<8x32xf32>
    %c0_1 = arith.constant 0 : index
    %c0_2 = arith.constant 0 : index
    %1 = vector.load %arg2[%c0_1, %c0_2] : memref<32x64xf32, #tpu.memory_space<vmem>>, vector<32x64xf32>
    %cst = arith.constant dense<0.000000e+00> : vector<8x64xf32>
    %2 = tpu.matmul %0, %1, %cst {dimension_numbers = #tpu.dot_dimension_numbers<[1], [0], [0], [1], [0, 0, 1, 1], [], []>} : vector<8x32xf32>, vector<32x64xf32>, vector<8x64xf32> -> vector<8x64xf32>
    %c0_3 = arith.constant 0 : index
    %c0_4 = arith.constant 0 : index
    %3 = vector.load %arg3[%c0_3, %c0_4] : memref<1x64xf32, #tpu.memory_space<vmem>>, vector<1x64xf32>
    %4 = vector.broadcast %3 : vector<1x64xf32> to vector<8x64xf32>
    %5 = arith.addf %2, %4 : vector<8x64xf32>
    %6 = math.tanh %5 : vector<8x64xf32>
    %c0_5 = arith.constant 0 : index
    %c0_6 = arith.constant 0 : index
    %7 = vector.load %arg4[%c0_5, %c0_6] : memref<64x32xf32, #tpu.memory_space<vmem>>, vector<64x32xf32>
    %cst_7 = arith.constant dense<0.000000e+00> : vector<8x32xf32>
    %8 = tpu.matmul %6, %7, %cst_7 {dimension_numbers = #tpu.dot_dimension_numbers<[1], [0], [0], [1], [0, 0, 1, 1], [], []>} : vector<8x64xf32>, vector<64x32xf32>, vector<8x32xf32> -> vector<8x32xf32>
    %c0_8 = arith.constant 0 : index
    %c0_9 = arith.constant 0 : index
    %9 = vector.load %arg5[%c0_8, %c0_9] : memref<1x32xf32, #tpu.memory_space<vmem>>, vector<1x32xf32>
    %10 = vector.broadcast %9 : vector<1x32xf32> to vector<8x32xf32>
    %11 = arith.addf %8, %10 : vector<8x32xf32>
    %c0_10 = arith.constant 0 : index
    %c0_11 = arith.constant 0 : index
    %12 = vector.load %arg6[%c0_10, %c0_11] : memref<8x32xf32, #tpu.memory_space<vmem>>, vector<8x32xf32>
    tpu.vector_store %arg6[%c0_10, %c0_11], %11 {strides = array<i32>} : memref<8x32xf32, #tpu.memory_space<vmem>>, vector<8x32xf32>,
    return
  }
  func.func @transform_0(%arg0: i32) -> (i32, i32) {
    %c0_i32 = arith.constant 0 : i32
    %c0_i32_0 = arith.constant 0 : i32
    return %arg0, %c0_i32 : i32, i32
  }
  func.func @transform_1(%arg0: i32) -> (i32, i32) {
    %c0_i32 = arith.constant 0 : i32
    %c0_i32_0 = arith.constant 0 : i32
    %c0_i32_1 = arith.constant 0 : i32
    return %c0_i32, %c0_i32_0 : i32, i32
  }
  func.func @transform_2(%arg0: i32) -> (i32, i32) {
    %c0_i32 = arith.constant 0 : i32
    %c0_i32_0 = arith.constant 0 : i32
    %c0_i32_1 = arith.constant 0 : i32
    return %c0_i32, %c0_i32_0 : i32, i32
  }
  func.func @transform_3(%arg0: i32) -> (i32, i32) {
    %c0_i32 = arith.constant 0 : i32
    %c0_i32_0 = arith.constant 0 : i32
    %c0_i32_1 = arith.constant 0 : i32
    return %c0_i32, %c0_i32_0 : i32, i32
  }
  func.func @transform_4(%arg0: i32) -> (i32, i32) {
    %c0_i32 = arith.constant 0 : i32
    %c0_i32_0 = arith.constant 0 : i32
    %c0_i32_1 = arith.constant 0 : i32
    return %c0_i32, %c0_i32_0 : i32, i32
  }
  func.func @transform_5(%arg0: i32) -> (i32, i32) {
    %c0_i32 = arith.constant 0 : i32
    %c0_i32_0 = arith.constant 0 : i32
    return %arg0, %c0_i32 : i32, i32
  }
}

</mosaic_0001>

<llo_original>
// kernel: tpu_custom_call.1
$region0: #{tpu_custom_call.1}
  #allocation0 [shape = 'u32[]', space=smem, size = 0x4, offset = 0x4, fixed_abs, tag = 'smem constant byte address 0x4 - core index']
  #allocation1 [shape = 'u32[144,128]{1,0:T(1,128)}', space=vmem, size = 0x12000, scoped, tag = 'internal scratch']
  %s0 = inlined_call_operand.vmem [shape: f32[16,32], index: 0, kind: input, shape index: {}]
  %s1 = inlined_call_operand.vmem [shape: f32[32,64], index: 1, kind: input, shape index: {}]
  %s2 = inlined_call_operand.vmem [shape: f32[1,64], index: 2, kind: input, shape index: {}]
  %s3 = inlined_call_operand.vmem [shape: f32[64,32], index: 3, kind: input, shape index: {}]
  %s4 = inlined_call_operand.vmem [shape: f32[1,32], index: 4, kind: input, shape index: {}]
  %s5 = inlined_call_operand.hbm [shape: f32[16,32], index: 5, kind: output, shape index: {}]
  %s6 = sld [smem:[#allocation0]]
  $region53: #{tpu_custom_call.1} parent=0
    _
  %s8 = ssub.s32 1, %s6
  %s9 = scalar_select 0, %s8, %s6
  $region1: #{tpu_custom_call.1} parent=0
    #allocation2 [shape = 'u8[8192]{0}', space=vmem, size = 0x2000, scoped, tag = 'output window, operand 0']
    #allocation3 [shape = 's32[2]{0}', space=sflag, size = 0x8, scoped, tag = 'scoped memory for tpu_custom_call.1']
    %10 = vsyncpa [#allocation3], 0
    %s11 = scalar_lea.sflag [#allocation3], 1
    %12 = vsyncpa %s11, 0
    loop: start=0, step=1, limit=4
    $region2: #{tpu_custom_call.1} parent=1 // loop_pre_header
      _
    $region3: #{tpu_custom_call.1} parent=1 // loop_header
      %s14 = sphi 0, %s18
      %p15 = scmp.ge.s32.totalorder %s14, 4
      %s24 = sphi 0, %s26
      %s27 = sphi 0, %s24
      %s28 = sphi 0, %s27
      %s44 = sphi 0, %s28
      %s48 = sphi 0, %s48
      %s50 = sphi 0, %s48
      %s51 = sphi 0, %s50
      %s65 = sphi 0, %s51
      %s69 = sphi 0, %s69
      %s71 = sphi 0, %s69
      %s72 = sphi 0, %s71
      %s86 = sphi 0, %s72
      %s90 = sphi 0, %s90
      %s92 = sphi 0, %s90
      %s93 = sphi 0, %s92
      %s107 = sphi 0, %s93
      %s111 = sphi 0, %s111
      %s113 = sphi 0, %s111
      %s114 = sphi 0, %s113
      %s128 = sphi 0, %s114
      %s134 = sphi 0, %s136
      %s137 = sphi 0, %s134
      %s138 = sphi 0, %s137
      %s154 = sphi 0, %s138
    $region4: #{tpu_custom_call.1} parent=1 // loop_header_branch
      %17 = sbr.rel (%p15) target = $region8
    $region5: #{tpu_custom_call.1} parent=1 // loop_body
      %s19 = ssub.s32 %s14, 1
      %s20 = ssub.s32 %s14, 2
      %s21 = sadd.s32 %s14, 1
      %s22 = ssub.s32 %s14, %s21
      %p23 = scmp.eq.s32.totalorder %s22, 0
      %s25 = sadd.s32 %s24, 1
      %s26 = scalar_select %p23, %s24, %s25
      %p29 = pneg %p23
      %p30 = scmp.eq.s32.totalorder %s14, 1
      %p31 = por %p29, %p30
      %p32 = scmp.ne.s32.totalorder %s24, %s27
      %p33 = scmp.eq.s32.totalorder %s14, 0
      %p34 = por %p32, %p33
      %p35 = scmp.ne.s32.totalorder %s24, %s27
      %p36 = scmp.eq.s32.totalorder %s19, 1
      %p37 = por %p35, %p36
      %p38 = scmp.ne.s32.totalorder %s27, %s28
      %p39 = scmp.eq.s32.totalorder %s19, 0
      %p40 = por %p38, %p39
      %p41 = scmp.ne.s32.totalorder %s27, %s28
      %p42 = scmp.eq.s32.totalorder %s20, 1
      %p43 = por %p41, %p42
      %p45 = scmp.ne.s32.totalorder %s28, %s44
      %p46 = scmp.eq.s32.totalorder %s20, 0
      %p47 = por %p45, %p46
      %s49 = sadd.s32 %s48, 1
      %p52 = scmp.eq.s32.totalorder %s14, 1
      %p53 = scmp.ne.s32.totalorder %s48, %s50
      %p54 = scmp.eq.s32.totalorder %s14, 0
      %p55 = por %p53, %p54
      %p56 = scmp.ne.s32.totalorder %s48, %s50
      %p57 = scmp.eq.s32.totalorder %s19, 1
      %p58 = por %p56, %p57
      %p59 = scmp.ne.s32.totalorder %s50, %s51
      %p60 = scmp.eq.s32.totalorder %s19, 0
      %p61 = por %p59, %p60
      %p62 = scmp.ne.s32.totalorder %s50, %s51
      %p63 = scmp.eq.s32.totalorder %s20, 1
      %p64 = por %p62, %p63
      %p66 = scmp.ne.s32.totalorder %s51, %s65
      %p67 = scmp.eq.s32.totalorder %s20, 0
      %p68 = por %p66, %p67
      %s70 = sadd.s32 %s69, 1
      %p73 = scmp.eq.s32.totalorder %s14, 1
      %p74 = scmp.ne.s32.totalorder %s69, %s71
      %p75 = scmp.eq.s32.totalorder %s14, 0
      %p76 = por %p74, %p75
      %p77 = scmp.ne.s32.totalorder %s69, %s71
      %p78 = scmp.eq.s32.totalorder %s19, 1
      %p79 = por %p77, %p78
      %p80 = scmp.ne.s32.totalorder %s71, %s72
      %p81 = scmp.eq.s32.totalorder %s19, 0
      %p82 = por %p80, %p81
      %p83 = scmp.ne.s32.totalorder %s71, %s72
      %p84 = scmp.eq.s32.totalorder %s20, 1
      %p85 = por %p83, %p84
      %p87 = scmp.ne.s32.totalorder %s72, %s86
      %p88 = scmp.eq.s32.totalorder %s20, 0
      %p89 = por %p87, %p88
      %s91 = sadd.s32 %s90, 1
      %p94 = scmp.eq.s32.totalorder %s14, 1
      %p95 = scmp.ne.s32.totalorder %s90, %s92
      %p96 = scmp.eq.s32.totalorder %s14, 0
      %p97 = por %p95, %p96
      %p98 = scmp.ne.s32.totalorder %s90, %s92
      %p99 = scmp.eq.s32.totalorder %s19, 1
      %p100 = por %p98, %p99
      %p101 = scmp.ne.s32.totalorder %s92, %s93
      %p102 = scmp.eq.s32.totalorder %s19, 0
      %p103 = por %p101, %p102
      %p104 = scmp.ne.s32.totalorder %s92, %s93
      %p105 = scmp.eq.s32.totalorder %s20, 1
      %p106 = por %p104, %p105
      %p108 = scmp.ne.s32.totalorder %s93, %s107
      %p109 = scmp.eq.s32.totalorder %s20, 0
      %p110 = por %p108, %p109
      %s112 = sadd.s32 %s111, 1
      %p115 = scmp.eq.s32.totalorder %s14, 1
      %p116 = scmp.ne.s32.totalorder %s111, %s113
      %p117 = scmp.eq.s32.totalorder %s14, 0
      %p118 = por %p116, %p117
      %p119 = scmp.ne.s32.totalorder %s111, %s113
      %p120 = scmp.eq.s32.totalorder %s19, 1
      %p121 = por %p119, %p120
      %p122 = scmp.ne.s32.totalorder %s113, %s114
      %p123 = scmp.eq.s32.totalorder %s19, 0
      %p124 = por %p122, %p123
      %p125 = scmp.ne.s32.totalorder %s113, %s114
      %p126 = scmp.eq.s32.totalorder %s20, 1
      %p127 = por %p125, %p126
      %p129 = scmp.ne.s32.totalorder %s114, %s128
      %p130 = scmp.eq.s32.totalorder %s20, 0
      %p131 = por %p129, %p130
      %s132 = ssub.s32 %s14, %s21
      %p133 = scmp.eq.s32.totalorder %s132, 0
      %s135 = sadd.s32 %s134, 1
      %s136 = scalar_select %p133, %s134, %s135
      %p139 = pneg %p133
      %p140 = scmp.eq.s32.totalorder %s14, 1
      %p141 = por %p139, %p140
      %p142 = scmp.ne.s32.totalorder %s134, %s137
      %p143 = scmp.eq.s32.totalorder %s14, 0
      %p144 = por %p142, %p143
      %p145 = scmp.ne.s32.totalorder %s134, %s137
      %p146 = scmp.eq.s32.totalorder %s19, 1
      %p147 = por %p145, %p146
      %p148 = scmp.ne.s32.totalorder %s137, %s138
      %p149 = scmp.eq.s32.totalorder %s19, 0
      %p150 = por %p148, %p149
      %p151 = scmp.ne.s32.totalorder %s137, %s138
      %p152 = scmp.eq.s32.totalorder %s20, 1
      %p153 = por %p151, %p152
      %p155 = scmp.ne.s32.totalorder %s138, %s154
      %p156 = scmp.eq.s32.totalorder %s20, 0
      %p157 = por %p155, %p156
      %p158 = scmp.le.s32.totalorder 1, %s14
      %p159 = scmp.lt.s32.totalorder %s14, 3
      %p160 = pnand %p158, %p159
      %p161 = pneg %p160
      // Predicated region
      $region9: #{tpu_custom_call.1} parent=5 // pred_check
        _
      $region10: #{tpu_custom_call.1} parent=5 // pred_check_branch
        %163 = sbr.rel (%p160) target = $region12
      $region11: #{tpu_custom_call.1} parent=5 // pred_region
        %s164 = ssub.s32 %s14, 1
        // Predicated region
        $region13: #{tpu_custom_call.1} parent=11 // pred_check
          %p165 = pneg %p61
        $region14: #{tpu_custom_call.1} parent=11 // pred_check_branch
          %167 = sbr.rel (%p165) target = $region16
        $region15: #{tpu_custom_call.1} parent=11 // pred_region
          _
        $region16: #{tpu_custom_call.1} parent=11 // pred_fallthru
          _
        // Predicated region
        $region17: #{tpu_custom_call.1} parent=11 // pred_check
          %p168 = pneg %p82
        $region18: #{tpu_custom_call.1} parent=11 // pred_check_branch
          %170 = sbr.rel (%p168) target = $region20
        $region19: #{tpu_custom_call.1} parent=11 // pred_region
          _
        $region20: #{tpu_custom_call.1} parent=11 // pred_fallthru
          _
        // Predicated region
        $region21: #{tpu_custom_call.1} parent=11 // pred_check
          %p171 = pneg %p103
        $region22: #{tpu_custom_call.1} parent=11 // pred_check_branch
          %173 = sbr.rel (%p171) target = $region24
        $region23: #{tpu_custom_call.1} parent=11 // pred_region
          _
        $region24: #{tpu_custom_call.1} parent=11 // pred_fallthru
          _
        // Predicated region
        $region25: #{tpu_custom_call.1} parent=11 // pred_check
          %p174 = pneg %p124
        $region26: #{tpu_custom_call.1} parent=11 // pred_check_branch
          %176 = sbr.rel (%p174) target = $region28
        $region27: #{tpu_custom_call.1} parent=11 // pred_region
          _
        $region28: #{tpu_custom_call.1} parent=11 // pred_fallthru
          _
      $region12: #{tpu_custom_call.1} parent=5 // pred_fallthru
        _
      %p177 = scmp.lt.s32.totalorder %s14, 2
      // Predicated region
      $region29: #{tpu_custom_call.1} parent=5 // pred_check
        %p178 = pneg %p177
      $region30: #{tpu_custom_call.1} parent=5 // pred_check_branch
        %180 = sbr.rel (%p178) target = $region32
      $region31: #{tpu_custom_call.1} parent=5 // pred_region
        // Predicated region
        $region33: #{tpu_custom_call.1} parent=31 // pred_check
          %p181 = pneg %p34
        $region34: #{tpu_custom_call.1} parent=31 // pred_check_branch
          %183 = sbr.rel (%p181) target = $region36
        $region35: #{tpu_custom_call.1} parent=31 // pred_region
          %p184 = scmp.lt.s32.totalorder %s14, 1
          %s185 = scalar_select %p184, %s14, 1
          %s186 = smul.addr %s185, 8
          %s187 = scalar_lea.vmem %s0, %s186
        $region36: #{tpu_custom_call.1} parent=31 // pred_fallthru
          _
      $region32: #{tpu_custom_call.1} parent=5 // pred_fallthru
        _
      %p188 = scmp.le.s32.totalorder 1, %s14
      %p189 = scmp.lt.s32.totalorder %s14, 3
      %p190 = pnand %p188, %p189
      %p191 = pneg %p190
      // Predicated region
      $region37: #{tpu_custom_call.1} parent=5 // pred_check
        _
      $region38: #{tpu_custom_call.1} parent=5 // pred_check_branch
        %193 = sbr.rel (%p190) target = $region40
      $region39: #{tpu_custom_call.1} parent=5 // pred_region
        %s194 = ssub.s32 %s14, 1
        %p195 = scmp.lt.s32.totalorder %s19, 1
        %s196 = scalar_select %p195, %s19, 1
        %s197 = smul.addr %s196, 8
        %s198 = scalar_lea.vmem %s0, %s197
        %p199 = pneg %p40
        %p200 = pneg %p37
        %p201 = pneg %p61
        %p202 = pneg %p58
        %p203 = pneg %p82
        %p204 = pneg %p79
        %p205 = pneg %p103
        %p206 = pneg %p100
        %p207 = pneg %p124
        %p208 = pneg %p121
        %p209 = pneg %p150
        %p210 = pneg %p147
        %s211 = sand.u32 %s137, 1
        %s212 = scalar_lea.sflag [#allocation3], %s211
        %s213 = sand.u32 %s137, 1
        %s214 = smul.addr %s213, 8
        %s215 = scalar_lea.vmem [#allocation2], %s214
        %p216 = scmp.lt.s32.totalorder %s19, 1
        %s217 = scalar_select %p216, %s19, 1
        %s218 = smul.addr %s217, 8
        %s219 = scalar_lea.vmem %s0, %s218
        %v220 = vld [vmem:[%s219] sm:$0xff]
        %v221 = vld [vmem:[%s1] sm:$0xff]
        %v222 = vld [vmem:[%s1 + $0x8] sm:$0xff]
        %v223 = vld [vmem:[%s1 + $0x10] sm:$0xff]
        %v224 = vld [vmem:[%s1 + $0x18] sm:$0xff]
        %v225 = vld [vmem:[%s2] sm:$0x1]
        %v227 = vlaneseq
        %v228 = vshrl.u32 %v227, 7
        %v229 = vsub.s32 0, %v228
        %v230 = vrot.slane %v225, %v229
        %vm232 = vcmask 261120
        %v234 = vsel %vm232, %v220, 0
        %236 = vmatprep.subr.mxu0 0.0
        %237 = vmatpush1.msra.mxu0 0.0
        %238 = vmatprep.subr.mxu0 0.0
        %239 = vmatpush1.msra.mxu0 0.0
        %240 = vmatprep.subr.mxu0 0.0
        %241 = vmatpush1.msra.mxu0 0.0
        %242 = vmatprep.subr.mxu0 0.0
        %243 = vmatpush1.msra.mxu0 0.0
        %244 = vmatprep.subr.mxu0 0.0
        %245 = vmatpush1.msra.mxu0 0.0
        %246 = vmatprep.subr.mxu0 0.0
        %247 = vmatpush1.msra.mxu0 0.0
        %248 = vmatprep.subr.mxu0 0.0
        %249 = vmatpush1.msra.mxu0 0.0
        %250 = vmatprep.subr.mxu0 0.0
        %251 = vmatpush1.msra.mxu0 0.0
        %252 = vmatprep.subr.mxu0 0.0
        %253 = vmatpush1.msra.mxu0 0.0
        %254 = vmatprep.subr.mxu0 0.0
        %255 = vmatpush1.msra.mxu0 0.0
        %256 = vmatprep.subr.mxu0 0.0
        %257 = vmatpush1.msra.mxu0 0.0
        %258 = vmatprep.subr.mxu0 0.0
        %259 = vmatpush1.msra.mxu0 0.0
        %260 = vmatprep.subr.mxu0 0.0
        %261 = vmatpush1.msra.mxu0 %v224
        %262 = vmatprep.subr.mxu0 0.0
        %263 = vmatpush1.msra.mxu0 %v223
        %264 = vmatprep.subr.mxu0 0.0
        %265 = vmatpush1.msra.mxu0 %v222
        %266 = vmatprep.subr.mxu0 0.0
        %267 = vmatpush1.msra.mxu0 %v221
        %268 = vmatprep.subr.mxu0 0.0
        %269 = vmatpush2.msra.mxu0 0.0
        %270 = vmatprep.subr.mxu0 0.0
        %271 = vmatpush2.msra.mxu0 0.0
        %272 = vmatprep.subr.mxu0 0.0
        %273 = vmatpush2.msra.mxu0 0.0
        %274 = vmatprep.subr.mxu0 0.0
        %275 = vmatpush2.msra.mxu0 0.0
        %276 = vmatprep.subr.mxu0 0.0
        %277 = vmatpush2.msra.mxu0 0.0
        %278 = vmatprep.subr.mxu0 0.0
        %279 = vmatpush2.msra.mxu0 0.0
        %280 = vmatprep.subr.mxu0 0.0
        %281 = vmatpush2.msra.mxu0 0.0
        %282 = vmatprep.subr.mxu0 0.0
        %283 = vmatpush2.msra.mxu0 0.0
        %284 = vmatprep.subr.mxu0 0.0
        %285 = vmatpush2.msra.mxu0 0.0
        %286 = vmatprep.subr.mxu0 0.0
        %287 = vmatpush2.msra.mxu0 0.0
        %288 = vmatprep.subr.mxu0 0.0
        %289 = vmatpush2.msra.mxu0 0.0
        %290 = vmatprep.subr.mxu0 0.0
        %291 = vmatpush2.msra.mxu0 0.0
        %292 = vmatprep.subr.mxu0 0.0
        %293 = vmatpush2.msra.mxu0 0.0
        %294 = vmatprep.subr.mxu0 0.0
        %295 = vmatpush2.msra.mxu0 0.0
        %296 = vmatprep.subr.mxu0 0.0
        %297 = vmatpush2.msra.mxu0 0.0
        %298 = vmatprep.subr.mxu0 0.0
        %299 = vmatpush2.msra.mxu0 0.0
        %300 = vmatprep.mubr.f32.mxu0 0.0
        %301 = vmatmul.mubr.f32.gmra.mxu0 %v234
        %v302 = vpop.f32.mrf.mxu0
        %v303 = vadd.f32 %v230, %v302
        %v304 = vpop.f32.mrf.mxu0
        %305 = vdwg.mxu0
        %v306 = vtanh.pop %v303
        %v307 = vld [vmem:[%s3] sm:$0xff]
        %v308 = vld [vmem:[%s3 + $0x8] sm:$0xff]
        %v309 = vld [vmem:[%s3 + $0x10] sm:$0xff]
        %v310 = vld [vmem:[%s3 + $0x18] sm:$0xff]
        %v311 = vld [vmem:[%s3 + $0x20] sm:$0xff]
        %v312 = vld [vmem:[%s3 + $0x28] sm:$0xff]
        %v313 = vld [vmem:[%s3 + $0x30] sm:$0xff]
        %v314 = vld [vmem:[%s3 + $0x38] sm:$0xff]
        %v315 = vld [vmem:[%s4] sm:$0x1]
        %v317 = vlaneseq
        %v318 = vshrl.u32 %v317, 7
        %v319 = vsub.s32 0, %v318
        %v320 = vrot.slane %v315, %v319
        %vm322 = vcmask 523264
        %v324 = vsel %vm322, %v306, 0
        %326 = vmatprep.subr.mxu0 0.0
        %327 = vmatpush1.msra.mxu0 0.0
        %328 = vmatprep.subr.mxu0 0.0
        %329 = vmatpush1.msra.mxu0 0.0
        %330 = vmatprep.subr.mxu0 0.0
        %331 = vmatpush1.msra.mxu0 0.0
        %332 = vmatprep.subr.mxu0 0.0
        %333 = vmatpush1.msra.mxu0 0.0
        %334 = vmatprep.subr.mxu0 0.0
        %335 = vmatpush1.msra.mxu0 0.0
        %336 = vmatprep.subr.mxu0 0.0
        %337 = vmatpush1.msra.mxu0 0.0
        %338 = vmatprep.subr.mxu0 0.0
        %339 = vmatpush1.msra.mxu0 0.0
        %340 = vmatprep.subr.mxu0 0.0
        %341 = vmatpush1.msra.mxu0 0.0
        %342 = vmatprep.subr.mxu0 0.0
        %343 = vmatpush1.msra.mxu0 %v314
        %344 = vmatprep.subr.mxu0 0.0
        %345 = vmatpush1.msra.mxu0 %v313
        %346 = vmatprep.subr.mxu0 0.0
        %347 = vmatpush1.msra.mxu0 %v312
        %348 = vmatprep.subr.mxu0 0.0
        %349 = vmatpush1.msra.mxu0 %v311
        %350 = vmatprep.subr.mxu0 0.0
        %351 = vmatpush1.msra.mxu0 %v310
        %352 = vmatprep.subr.mxu0 0.0
        %353 = vmatpush1.msra.mxu0 %v309
        %354 = vmatprep.subr.mxu0 0.0
        %355 = vmatpush1.msra.mxu0 %v308
        %356 = vmatprep.subr.mxu0 0.0
        %357 = vmatpush1.msra.mxu0 %v307
        %358 = vmatprep.subr.mxu0 0.0
        %359 = vmatpush2.msra.mxu0 0.0
        %360 = vmatprep.subr.mxu0 0.0
        %361 = vmatpush2.msra.mxu0 0.0
        %362 = vmatprep.subr.mxu0 0.0
        %363 = vmatpush2.msra.mxu0 0.0
        %364 = vmatprep.subr.mxu0 0.0
        %365 = vmatpush2.msra.mxu0 0.0
        %366 = vmatprep.subr.mxu0 0.0
        %367 = vmatpush2.msra.mxu0 0.0
        %368 = vmatprep.subr.mxu0 0.0
        %369 = vmatpush2.msra.mxu0 0.0
        %370 = vmatprep.subr.mxu0 0.0
        %371 = vmatpush2.msra.mxu0 0.0
        %372 = vmatprep.subr.mxu0 0.0
        %373 = vmatpush2.msra.mxu0 0.0
        %374 = vmatprep.subr.mxu0 0.0
        %375 = vmatpush2.msra.mxu0 0.0
        %376 = vmatprep.subr.mxu0 0.0
        %377 = vmatpush2.msra.mxu0 0.0
        %378 = vmatprep.subr.mxu0 0.0
        %379 = vmatpush2.msra.mxu0 0.0
        %380 = vmatprep.subr.mxu0 0.0
        %381 = vmatpush2.msra.mxu0 0.0
        %382 = vmatprep.subr.mxu0 0.0
        %383 = vmatpush2.msra.mxu0 0.0
        %384 = vmatprep.subr.mxu0 0.0
        %385 = vmatpush2.msra.mxu0 0.0
        %386 = vmatprep.subr.mxu0 0.0
        %387 = vmatpush2.msra.mxu0 0.0
        %388 = vmatprep.subr.mxu0 0.0
        %389 = vmatpush2.msra.mxu0 0.0
        %390 = vmatprep.mubr.f32.mxu0 0.0
        %391 = vmatmul.mubr.f32.gmra.mxu0 %v324
        %v392 = vpop.f32.mrf.mxu0
        %v393 = vadd.f32 %v320, %v392
        %v394 = vpop.f32.mrf.mxu0
        %395 = vdwg.mxu0
        %396 = vst.msk [vmem:[%s215] sm:$0xff] %vm232, %v393
        %s397 = sand.u32 %s137, 1
        %s398 = scalar_lea.sflag [#allocation3], %s397
        %s399 = sand.u32 %s137, 1
        %s400 = smul.addr %s399, 8
        %s401 = scalar_lea.vmem [#allocation2], %s400
        // Predicated region
        $region41: #{tpu_custom_call.1} parent=39 // pred_check
          %p402 = pneg %p147
        $region42: #{tpu_custom_call.1} parent=39 // pred_check_branch
          %404 = sbr.rel (%p402) target = $region44
        $region43: #{tpu_custom_call.1} parent=39 // pred_region
          %s406 = ssub.s32 128, 128
          %407 = vsyncadd %s398, %s406
          %s408 = smul.addr %s19, 128
          %s409 = scalar_lea.hbm %s5, %s408
          %s411 = sshll.u32 %s401, 4
          %s412 = int_to_ptr.vmem [resolvable:$true] %s411
          %414 = dma.vmem_to_hbm [thread:$0]  %s412, 128, %s409, %s398
        $region44: #{tpu_custom_call.1} parent=39 // pred_fallthru
          _
      $region40: #{tpu_custom_call.1} parent=5 // pred_fallthru
        _
      %p415 = scmp.le.s32.totalorder 2, %s14
      // Predicated region
      $region45: #{tpu_custom_call.1} parent=5 // pred_check
        %p416 = pneg %p415
      $region46: #{tpu_custom_call.1} parent=5 // pred_check_branch
        %418 = sbr.rel (%p416) target = $region48
      $region47: #{tpu_custom_call.1} parent=5 // pred_region
        %s419 = ssub.s32 %s14, 2
        // Predicated region
        $region49: #{tpu_custom_call.1} parent=47 // pred_check
          %p420 = pneg %p153
        $region50: #{tpu_custom_call.1} parent=47 // pred_check_branch
          %422 = sbr.rel (%p420) target = $region52
        $region51: #{tpu_custom_call.1} parent=47 // pred_region
          %s423 = sand.u32 %s138, 1
          %s424 = scalar_lea.sflag [#allocation3], %s423
          %s425 = sand.u32 %s138, 1
          %s426 = smul.addr %s425, 8
          %s427 = scalar_lea.vmem [#allocation2], %s426
          %428 = dma.done %s424, 128
        $region52: #{tpu_custom_call.1} parent=47 // pred_fallthru
          _
      $region48: #{tpu_custom_call.1} parent=5 // pred_fallthru
        _
    $region6: #{tpu_custom_call.1} parent=1 // loop_footer
      %s18 = sadd.s32 1, %s14
    $region7: #{tpu_custom_call.1} parent=1 // loop_footer_branch
      %13 = sbr.rel target = $region3
    $region8: #{tpu_custom_call.1} parent=1 // loop_exit
      _
    %429 = vsyncpa [#allocation3], 1
    %s430 = scalar_lea.sflag [#allocation3], 1
    %431 = vsyncpa %s430, 1

</llo_original>
